<compile_context>
chip_gen: v5e
topology: v5e:2x2
jax: 0.10.0
libtpu: 0.0.40
codegen_flags: <defaults>
</compile_context>

<pallas_src>
import functools

import jax
import jax.numpy as jnp
from jax.experimental import pallas as pl
from jax.experimental.pallas import tpu as pltpu


def _maxpool_kernel(x_ref, o_ref, *, k, Wo, C):
    # x_ref block: (1, Rb, k*Wo, k*C); o_ref block: (1, Rb, Wo, C)
    x = x_ref[0]                                    # (Rb, k*Wo, k*C)
    # window-column reduce: contiguous lane chunks of width C
    y = x[:, :, 0:C]
    for wc in range(1, k):
        y = jnp.maximum(y, x[:, :, wc * C:(wc + 1) * C])
    # window-row reduce: contiguous sublane chunks of height Wo
    z = y[:, 0:Wo, :]
    for r in range(1, k):
        z = jnp.maximum(z, y[:, r * Wo:(r + 1) * Wo, :])
    o_ref[0] = z


def _pick_block_rows(N, Ho, Wo, C, k, itemsize, target_bytes=4 << 20):
    """Choose output rows per grid step so the padded input block is ~4 MiB."""
    lanes = -(-(k * C) // 128) * 128            # lane padding of the VMEM tile
    sublanes = -(-(k * Wo) // 8) * 8            # sublane padding
    per_out_row = sublanes * lanes * itemsize
    rb = max(1, target_bytes // per_out_row)
    rb = int(min(Ho, rb))
    if N == 1 and Ho > 1:
        # keep >= 2 grid steps so both TensorCores (v7x) get work
        rb = min(rb, -(-Ho // 2))
    return max(1, rb)


def maxpool2d(x, k=2):
    """nn.MaxPool2d(kernel_size=k, stride=k) on NCHW input (floor mode)."""
    N, C, H, W = x.shape
    Ho, Wo = H // k, W // k
    if Ho == 0 or Wo == 0:
        # TODO(synk): PyTorch raises for H < k or W < k; we return an empty tensor.
        return jnp.zeros((N, C, Ho, Wo), x.dtype)

    # floor-mode crop (PyTorch drops the trailing remainder)
    x = x[:, :, : Ho * k, : Wo * k]

    # NCHW -> NHWC -> folded-window view (reshape is a free row-major regroup;
    # XLA fuses it with the transpose into a single relayout pass).
    x_nhwc = jnp.transpose(x, (0, 2, 3, 1))                  # (N, Ho*k, Wo*k, C)
    x_v = x_nhwc.reshape(N, Ho, k * Wo, k * C)

    itemsize = jnp.dtype(x.dtype).itemsize
    rb = _pick_block_rows(N, Ho, Wo, C, k, itemsize)
    n_row_blocks = pl.cdiv(Ho, rb)

    in_bytes = N * Ho * (k * Wo) * (k * C) * itemsize
    out_bytes = N * Ho * Wo * C * itemsize

    out_nhwc = pl.pallas_call(
        functools.partial(_maxpool_kernel, k=k, Wo=Wo, C=C),
        out_shape=jax.ShapeDtypeStruct((N, Ho, Wo, C), x.dtype),
        grid=(N, n_row_blocks),
        in_specs=[
            pl.BlockSpec((1, rb, k * Wo, k * C), lambda n, r: (n, r, 0, 0)),
        ],
        out_specs=pl.BlockSpec((1, rb, Wo, C), lambda n, r: (n, r, 0, 0)),
        compiler_params=pltpu.CompilerParams(
            dimension_semantics=("parallel", "parallel"),
            vmem_limit_bytes=64 * 1024 * 1024,
        ),
        cost_estimate=pl.CostEstimate(
            flops=N * Ho * Wo * C * (k * k - 1),
            transcendentals=0,
            bytes_accessed=in_bytes + out_bytes,
        ),
    )(x_v)

    # back to the module's NCHW contract
    return jnp.transpose(out_nhwc, (0, 3, 1, 2))


if __name__ == "__main__":
    key = jax.random.PRNGKey(0)
    N, C, H, W = 2, 4, 16, 16
    k = 2
    x = jax.random.normal(key, (N, C, H, W), dtype=jnp.float32)

    out = jax.jit(lambda v: maxpool2d(v, k=k))(x)
    out = jax.block_until_ready(out)

    # pure-JAX reference of nn.MaxPool2d(kernel_size=2, stride=2)
    ref = jnp.max(x.reshape(N, C, H // k, k, W // k, k), axis=(3, 5))
    assert out.shape == (N, C, H // k, W // k), out.shape
    assert out.dtype == x.dtype
    assert jnp.allclose(out, ref), "Pallas maxpool mismatch vs reference"

    print("KERNEL_OK")
</pallas_src>

<mosaic_0001>
module attributes {stable_mosaic.version = 11 : i64} {
  func.func @_maxpool_kernel(%arg0: i32, %arg1: i32, %arg2: memref<1x8x16x8xf32, #tpu.memory_space<vmem>>, %arg3: memref<1x8x8x4xf32, #tpu.memory_space<vmem>>) attributes {dimension_semantics = [#tpu.dimension_semantics<parallel>, #tpu.dimension_semantics<parallel>], iteration_bounds = array<i64: 2, 1>, scalar_prefetch = 0 : i64, scratch_operands = 0 : i64, tpu.core_type = #tpu.core_type<tc>, window_params = [{transform_indices = @transform_0, window_bounds = array<i64: 1, 8, 16, 8>}, {transform_indices = @transform_1, window_bounds = array<i64: 1, 8, 8, 4>}]} {
    %c0 = arith.constant 0 : index
    %c0_0 = arith.constant 0 : index
    %c0_1 = arith.constant 0 : index
    %c0_2 = arith.constant 0 : index
    %0 = vector.load %arg2[%c0, %c0_0, %c0_1, %c0_2] : memref<1x8x16x8xf32, #tpu.memory_space<vmem>>, vector<1x8x16x8xf32>
    %1 = vector.shape_cast %0 : vector<1x8x16x8xf32> to vector<8x16x8xf32>
    %2 = vector.extract_strided_slice %1 {offsets = [0, 0, 0], sizes = [8, 16, 4], strides = [1, 1, 1]} : vector<8x16x8xf32> to vector<8x16x4xf32>
    %3 = vector.extract_strided_slice %1 {offsets = [0, 0, 4], sizes = [8, 16, 4], strides = [1, 1, 1]} : vector<8x16x8xf32> to vector<8x16x4xf32>
    %4 = arith.maximumf %2, %3 : vector<8x16x4xf32>
    %5 = vector.extract_strided_slice %4 {offsets = [0, 0, 0], sizes = [8, 8, 4], strides = [1, 1, 1]} : vector<8x16x4xf32> to vector<8x8x4xf32>
    %6 = vector.extract_strided_slice %4 {offsets = [0, 8, 0], sizes = [8, 8, 4], strides = [1, 1, 1]} : vector<8x16x4xf32> to vector<8x8x4xf32>
    %7 = arith.maximumf %5, %6 : vector<8x8x4xf32>
    %c0_3 = arith.constant 0 : index
    %c0_4 = arith.constant 0 : index
    %c0_5 = arith.constant 0 : index
    %c0_6 = arith.constant 0 : index
    %8 = vector.load %arg3[%c0_3, %c0_4, %c0_5, %c0_6] : memref<1x8x8x4xf32, #tpu.memory_space<vmem>>, vector<1x8x8x4xf32>
    %9 = vector.shape_cast %8 : vector<1x8x8x4xf32> to vector<8x8x4xf32>
    %10 = vector.shape_cast %7 : vector<8x8x4xf32> to vector<1x8x8x4xf32>
    tpu.vector_store %arg3[%c0_3, %c0_4, %c0_5, %c0_6], %10 {strides = array<i32>} : memref<1x8x8x4xf32, #tpu.memory_space<vmem>>, vector<1x8x8x4xf32>,
    return
  }
  func.func @transform_0(%arg0: i32, %arg1: i32) -> (i32, i32, i32, i32) {
    %c0_i32 = arith.constant 0 : i32
    %c0_i32_0 = arith.constant 0 : i32
    %c0_i32_1 = arith.constant 0 : i32
    return %arg0, %arg1, %c0_i32, %c0_i32_0 : i32, i32, i32, i32
  }
  func.func @transform_1(%arg0: i32, %arg1: i32) -> (i32, i32, i32, i32) {
    %c0_i32 = arith.constant 0 : i32
    %c0_i32_0 = arith.constant 0 : i32
    %c0_i32_1 = arith.constant 0 : i32
    return %arg0, %arg1, %c0_i32, %c0_i32_0 : i32, i32, i32, i32
  }
}

</mosaic_0001>

<llo_original>
// kernel: _lambda_.1
$region0: #{_lambda_.1}
  #allocation0 [shape = 'u32[]', space=smem, size = 0x4, offset = 0x4, fixed_abs, tag = 'smem constant byte address 0x4 - core index']
  #allocation1 [shape = 'u32[72,128]{1,0:T(1,128)}', space=vmem, size = 0x9000, scoped, tag = 'internal scratch']
  %s0 = inlined_call_operand.vmem [shape: f32[2,8,16,8], index: 0, kind: input, shape index: {}]
  %s1 = inlined_call_operand.vmem [shape: f32[2,8,8,4], index: 1, kind: output, shape index: {}]
  %s2 = sld [smem:[#allocation0]]
  $region37: #{_lambda_.1} parent=0
    _
  %s4 = ssub.s32 1, %s2
  %s5 = scalar_select 0, %s4, %s2
  loop: start=0, step=1, limit=4
  $region2: #{_lambda_.1} parent=0 // loop_pre_header
    _
  $region3: #{_lambda_.1} parent=0 // loop_header
    %s7 = sphi 0, %s11
    %p8 = scmp.ge.s32.totalorder %s7, 4
    %s14 = sphi 0, %s26
    %s15 = sphi 0, %s22
    %s16 = sphi 0, %s14
    %s17 = sphi 0, %s15
    %s18 = sphi 0, %s16
    %s19 = sphi 0, %s17
    %s31 = sphi 0, %s33
    %s34 = sphi 0, %s31
    %s35 = sphi 0, %s34
    %s51 = sphi 0, %s35
    %s59 = sphi 0, %s61
    %s62 = sphi 0, %s59
    %s63 = sphi 0, %s62
    %s79 = sphi 0, %s63
  $region4: #{_lambda_.1} parent=0 // loop_header_branch
    %10 = sbr.rel (%p8) target = $region8
  $region5: #{_lambda_.1} parent=0 // loop_body
    %s12 = ssub.s32 %s7, 1
    %s13 = ssub.s32 %s7, 2
    %s20 = sadd.s32 1, %s15
    %p21 = scmp.ge.s32.totalorder %s20, 1
    %s22 = scalar_select %p21, 0, %s20
    %s23 = sadd.s32 1, %s14
    %s24 = scalar_select %p21, %s23, %s14
    %p25 = scmp.ge.s32.totalorder %s24, 2
    %s26 = scalar_select %p25, 0, %s24
    %s27 = ssub.s32 %s14, %s26
    %s28 = ssub.s32 %s15, %s22
    %s29 = sor.u32 %s27, %s28
    %p30 = scmp.eq.s32.totalorder %s29, 0
    %s32 = sadd.s32 %s31, 1
    %s33 = scalar_select %p30, %s31, %s32
    %p36 = pneg %p30
    %p37 = scmp.eq.s32.totalorder %s7, 1
    %p38 = por %p36, %p37
    %p39 = scmp.ne.s32.totalorder %s31, %s34
    %p40 = scmp.eq.s32.totalorder %s7, 0
    %p41 = por %p39, %p40
    %p42 = scmp.ne.s32.totalorder %s31, %s34
    %p43 = scmp.eq.s32.totalorder %s12, 1
    %p44 = por %p42, %p43
    %p45 = scmp.ne.s32.totalorder %s34, %s35
    %p46 = scmp.eq.s32.totalorder %s12, 0
    %p47 = por %p45, %p46
    %p48 = scmp.ne.s32.totalorder %s34, %s35
    %p49 = scmp.eq.s32.totalorder %s13, 1
    %p50 = por %p48, %p49
    %p52 = scmp.ne.s32.totalorder %s35, %s51
    %p53 = scmp.eq.s32.totalorder %s13, 0
    %p54 = por %p52, %p53
    %s55 = ssub.s32 %s14, %s26
    %s56 = ssub.s32 %s15, %s22
    %s57 = sor.u32 %s55, %s56
    %p58 = scmp.eq.s32.totalorder %s57, 0
    %s60 = sadd.s32 %s59, 1
    %s61 = scalar_select %p58, %s59, %s60
    %p64 = pneg %p58
    %p65 = scmp.eq.s32.totalorder %s7, 1
    %p66 = por %p64, %p65
    %p67 = scmp.ne.s32.totalorder %s59, %s62
    %p68 = scmp.eq.s32.totalorder %s7, 0
    %p69 = por %p67, %p68
    %p70 = scmp.ne.s32.totalorder %s59, %s62
    %p71 = scmp.eq.s32.totalorder %s12, 1
    %p72 = por %p70, %p71
    %p73 = scmp.ne.s32.totalorder %s62, %s63
    %p74 = scmp.eq.s32.totalorder %s12, 0
    %p75 = por %p73, %p74
    %p76 = scmp.ne.s32.totalorder %s62, %s63
    %p77 = scmp.eq.s32.totalorder %s13, 1
    %p78 = por %p76, %p77
    %p80 = scmp.ne.s32.totalorder %s63, %s79
    %p81 = scmp.eq.s32.totalorder %s13, 0
    %p82 = por %p80, %p81
    %p83 = scmp.le.s32.totalorder 1, %s7
    %p84 = scmp.lt.s32.totalorder %s7, 3
    %p85 = pnand %p83, %p84
    %p86 = pneg %p85
    // Predicated region
    $region9: #{_lambda_.1} parent=5 // pred_check
      _
    $region10: #{_lambda_.1} parent=5 // pred_check_branch
      %88 = sbr.rel (%p85) target = $region12
    $region11: #{_lambda_.1} parent=5 // pred_region
      %s89 = ssub.s32 %s7, 1
    $region12: #{_lambda_.1} parent=5 // pred_fallthru
      _
    %p90 = scmp.lt.s32.totalorder %s7, 2
    // Predicated region
    $region13: #{_lambda_.1} parent=5 // pred_check
      %p91 = pneg %p90
    $region14: #{_lambda_.1} parent=5 // pred_check_branch
      %93 = sbr.rel (%p91) target = $region16
    $region15: #{_lambda_.1} parent=5 // pred_region
      // Predicated region
      $region17: #{_lambda_.1} parent=15 // pred_check
        %p94 = pneg %p41
      $region18: #{_lambda_.1} parent=15 // pred_check_branch
        %96 = sbr.rel (%p94) target = $region20
      $region19: #{_lambda_.1} parent=15 // pred_region
        %s97 = smul.u32 8, %s15
        %p98 = scmp.lt.s32.totalorder %s14, 1
        %s99 = scalar_select %p98, %s14, 1
        %p100 = scmp.lt.s32.totalorder %s97, 7
        %s101 = scalar_select %p100, %s97, 7
        %s102 = smul.addr %s101, 2
        %s103 = smul.addr %s99, 16
        %s104 = sadd.s32 %s102, %s103
        %s105 = smul.addr %s104, 8
        %s106 = scalar_lea.vmem %s0, %s105
        %s107 = smul.u32 8, %s15
      $region20: #{_lambda_.1} parent=15 // pred_fallthru
        _
    $region16: #{_lambda_.1} parent=5 // pred_fallthru
      _
    %p108 = scmp.le.s32.totalorder 1, %s7
    %p109 = scmp.lt.s32.totalorder %s7, 3
    %p110 = pnand %p108, %p109
    %p111 = pneg %p110
    // Predicated region
    $region21: #{_lambda_.1} parent=5 // pred_check
      _
    $region22: #{_lambda_.1} parent=5 // pred_check_branch
      %113 = sbr.rel (%p110) target = $region24
    $region23: #{_lambda_.1} parent=5 // pred_region
      %s114 = ssub.s32 %s7, 1
      %s115 = smul.u32 8, %s17
      %p116 = scmp.lt.s32.totalorder %s16, 1
      %s117 = scalar_select %p116, %s16, 1
      %p118 = scmp.lt.s32.totalorder %s115, 7
      %s119 = scalar_select %p118, %s115, 7
      %s120 = smul.addr %s119, 2
      %s121 = smul.addr %s117, 16
      %s122 = sadd.s32 %s120, %s121
      %s123 = smul.addr %s122, 8
      %s124 = scalar_lea.vmem %s0, %s123
      %p125 = pneg %p47
      %p126 = pneg %p44
      %p127 = pneg %p75
      %p128 = pneg %p72
      %s129 = smul.u32 8, %s17
      %p130 = scmp.lt.s32.totalorder %s16, 1
      %s131 = scalar_select %p130, %s16, 1
      %p132 = scmp.lt.s32.totalorder %s129, 7
      %s133 = scalar_select %p132, %s129, 7
      %s134 = smul.addr %s131, 8
      %s135 = sadd.s32 %s133, %s134
      %s136 = smul.addr %s135, 8
      %s137 = scalar_lea.vmem %s1, %s136
      %s138 = smul.u32 8, %s17
      %p139 = scmp.lt.s32.totalorder %s16, 1
      %s140 = scalar_select %p139, %s16, 1
      %p141 = scmp.lt.s32.totalorder %s138, 7
      %s142 = scalar_select %p141, %s138, 7
      %s143 = smul.addr %s142, 2
      %s144 = smul.addr %s140, 16
      %s145 = sadd.s32 %s143, %s144
      %s146 = smul.addr %s145, 8
      %s147 = scalar_lea.vmem %s0, %s146
      %s148 = smul.u32 8, %s17
      %s149 = smul.u32 8, %s17
      %p150 = scmp.lt.s32.totalorder %s16, 1
      %s151 = scalar_select %p150, %s16, 1
      %p152 = scmp.lt.s32.totalorder %s149, 7
      %s153 = scalar_select %p152, %s149, 7
      %s154 = smul.addr %s151, 8
      %s155 = sadd.s32 %s153, %s154
      %s156 = smul.addr %s155, 8
      %s157 = scalar_lea.vmem %s1, %s156
      %s158 = smul.u32 8, %s17
      %v159 = vld [vmem:[%s147] sm:$0xff]
      %v160 = vld [vmem:[%s147 + $0x8] sm:$0xff]
      %v161 = vld [vmem:[%s147 + $0x10] sm:$0xff]
      %v162 = vld [vmem:[%s147 + $0x18] sm:$0xff]
      %v163 = vld [vmem:[%s147 + $0x20] sm:$0xff]
      %v164 = vld [vmem:[%s147 + $0x28] sm:$0xff]
      %v165 = vld [vmem:[%s147 + $0x30] sm:$0xff]
      %v166 = vld [vmem:[%s147 + $0x38] sm:$0xff]
      %v167 = vld [vmem:[%s147 + $0x40] sm:$0xff]
      %v168 = vld [vmem:[%s147 + $0x48] sm:$0xff]
      %v169 = vld [vmem:[%s147 + $0x50] sm:$0xff]
      %v170 = vld [vmem:[%s147 + $0x58] sm:$0xff]
      %v171 = vld [vmem:[%s147 + $0x60] sm:$0xff]
      %v172 = vld [vmem:[%s147 + $0x68] sm:$0xff]
      %v173 = vld [vmem:[%s147 + $0x70] sm:$0xff]
      %v174 = vld [vmem:[%s147 + $0x78] sm:$0xff]
      %191 = vrot.lane.b32.xlu0 %v159, 124
      %v192 = vpop.permute.xlu0 %191
      %193 = vrot.lane.b32.xlu0 %v160, 124
      %v194 = vpop.permute.xlu0 %193
      %195 = vrot.lane.b32.xlu0 %v161, 124
      %v196 = vpop.permute.xlu0 %195
      %197 = vrot.lane.b32.xlu0 %v162, 124
      %v198 = vpop.permute.xlu0 %197
      %199 = vrot.lane.b32.xlu0 %v163, 124
      %v200 = vpop.permute.xlu0 %199
      %201 = vrot.lane.b32.xlu0 %v164, 124
      %v202 = vpop.permute.xlu0 %201
      %203 = vrot.lane.b32.xlu0 %v165, 124
      %v204 = vpop.permute.xlu0 %203
      %205 = vrot.lane.b32.xlu0 %v166, 124
      %v206 = vpop.permute.xlu0 %205
      %207 = vrot.lane.b32.xlu0 %v167, 124
      %v208 = vpop.permute.xlu0 %207
      %209 = vrot.lane.b32.xlu0 %v168, 124
      %v210 = vpop.permute.xlu0 %209
      %211 = vrot.lane.b32.xlu0 %v169, 124
      %v212 = vpop.permute.xlu0 %211
      %213 = vrot.lane.b32.xlu0 %v170, 124
      %v214 = vpop.permute.xlu0 %213
      %215 = vrot.lane.b32.xlu0 %v171, 124
      %v216 = vpop.permute.xlu0 %215
      %217 = vrot.lane.b32.xlu0 %v172, 124
      %v218 = vpop.permute.xlu0 %217
      %219 = vrot.lane.b32.xlu0 %v173, 124
      %v220 = vpop.permute.xlu0 %219
      %221 = vrot.lane.b32.xlu0 %v174, 124
      %v222 = vpop.permute.xlu0 %221
      %v239 = vmax.f32 %v159, %v192
      %v240 = vmax.f32 %v160, %v194
      %v241 = vmax.f32 %v161, %v196
      %v242 = vmax.f32 %v162, %v198
      %v243 = vmax.f32 %v163, %v200
      %v244 = vmax.f32 %v164, %v202
      %v245 = vmax.f32 %v165, %v204
      %v246 = vmax.f32 %v166, %v206
      %v247 = vmax.f32 %v167, %v208
      %v248 = vmax.f32 %v168, %v210
      %v249 = vmax.f32 %v169, %v212
      %v250 = vmax.f32 %v170, %v214
      %v251 = vmax.f32 %v171, %v216
      %v252 = vmax.f32 %v172, %v218
      %v253 = vmax.f32 %v173, %v220
      %v254 = vmax.f32 %v174, %v222
      %v255 = vmax.f32 %v239, %v240
      %v256 = vmax.f32 %v241, %v242
      %v257 = vmax.f32 %v243, %v244
      %v258 = vmax.f32 %v245, %v246
      %v259 = vmax.f32 %v247, %v248
      %v260 = vmax.f32 %v249, %v250
      %v261 = vmax.f32 %v251, %v252
      %v262 = vmax.f32 %v253, %v254
      %vm263 = vcmask 31744
      %264 = vst.msk [vmem:[%s157] sm:$0xff] %vm263, %v255
      %265 = vst.msk [vmem:[%s157 + $0x8] sm:$0xff] %vm263, %v256
      %266 = vst.msk [vmem:[%s157 + $0x10] sm:$0xff] %vm263, %v257
      %267 = vst.msk [vmem:[%s157 + $0x18] sm:$0xff] %vm263, %v258
      %268 = vst.msk [vmem:[%s157 + $0x20] sm:$0xff] %vm263, %v259
      %269 = vst.msk [vmem:[%s157 + $0x28] sm:$0xff] %vm263, %v260
      %270 = vst.msk [vmem:[%s157 + $0x30] sm:$0xff] %vm263, %v261
      %271 = vst.msk [vmem:[%s157 + $0x38] sm:$0xff] %vm263, %v262
      %s272 = smul.u32 8, %s17
      %p273 = scmp.lt.s32.totalorder %s16, 1
      %s274 = scalar_select %p273, %s16, 1
      %p275 = scmp.lt.s32.totalorder %s272, 7
      %s276 = scalar_select %p275, %s272, 7
      %s277 = smul.addr %s274, 8
      %s278 = sadd.s32 %s276, %s277
      %s279 = smul.addr %s278, 8
      %s280 = scalar_lea.vmem %s1, %s279
      // Predicated region
      $region25: #{_lambda_.1} parent=23 // pred_check
        %p281 = pneg %p72
      $region26: #{_lambda_.1} parent=23 // pred_check_branch
        %283 = sbr.rel (%p281) target = $region28
      $region27: #{_lambda_.1} parent=23 // pred_region
        %s284 = smul.u32 8, %s17
      $region28: #{_lambda_.1} parent=23 // pred_fallthru
        _
    $region24: #{_lambda_.1} parent=5 // pred_fallthru
      _
    %p285 = scmp.le.s32.totalorder 2, %s7
    // Predicated region
    $region29: #{_lambda_.1} parent=5 // pred_check
      %p286 = pneg %p285
    $region30: #{_lambda_.1} parent=5 // pred_check_branch
      %288 = sbr.rel (%p286) target = $region32
    $region31: #{_lambda_.1} parent=5 // pred_region
      %s289 = ssub.s32 %s7, 2
      // Predicated region
      $region33: #{_lambda_.1} parent=31 // pred_check
        %p290 = pneg %p78
      $region34: #{_lambda_.1} parent=31 // pred_check_branch
        %292 = sbr.rel (%p290) target = $region36
      $region35: #{_lambda_.1} parent=31 // pred_region
        %s293 = smul.u32 8, %s19
        %p294 = scmp.lt.s32.totalorder %s18, 1
        %s295 = scalar_select %p294, %s18, 1
        %p296 = scmp.lt.s32.totalorder %s293, 7
        %s297 = scalar_select %p296, %s293, 7
        %s298 = smul.addr %s295, 8
        %s299 = sadd.s32 %s297, %s298
        %s300 = smul.addr %s299, 8
        %s301 = scalar_lea.vmem %s1, %s300
      $region36: #{_lambda_.1} parent=31 // pred_fallthru
        _
    $region32: #{_lambda_.1} parent=5 // pred_fallthru
      _
  $region6: #{_lambda_.1} parent=0 // loop_footer
    %s11 = sadd.s32 1, %s7
  $region7: #{_lambda_.1} parent=0 // loop_footer_branch
    %6 = sbr.rel target = $region3
  $region8: #{_lambda_.1} parent=0 // loop_exit
    _

</llo_original>
